<compile_context>
chip_gen: v5e
topology: v5e:2x2
jax: 0.10.0
libtpu: 0.0.40
codegen_flags: <defaults>
</compile_context>

<pallas_src>
import functools

import jax
import jax.numpy as jnp
from jax.experimental import pallas as pl
from jax.experimental.pallas import tpu as pltpu


def critic_kernel(s_ref, a_ref, w1s_ref, w1a_ref, b1_ref, w2_ref, b2_ref,
                  w3_ref, b3_ref, w4_ref, b4_ref, o_ref):
    # fc1 (split over [state; action]) + relu — bf16 MXU matmuls, f32 accumulation.
    h = jnp.dot(s_ref[...].astype(jnp.bfloat16), w1s_ref[...],
                preferred_element_type=jnp.float32)
    h = h + jnp.dot(a_ref[...].astype(jnp.bfloat16), w1a_ref[...],
                    preferred_element_type=jnp.float32)
    h = jnp.maximum(h + b1_ref[...], 0.0)          # f32 VPU epilogue
    # fc2 + relu
    h = jnp.dot(h.astype(jnp.bfloat16), w2_ref[...],
                preferred_element_type=jnp.float32)
    h = jnp.maximum(h + b2_ref[...], 0.0)
    # fc3 + relu
    h = jnp.dot(h.astype(jnp.bfloat16), w3_ref[...],
                preferred_element_type=jnp.float32)
    h = jnp.maximum(h + b3_ref[...], 0.0)
    # q_out (no activation); b4 is a scalar pulled from SMEM.
    q = jnp.dot(h.astype(jnp.bfloat16), w4_ref[...],
                preferred_element_type=jnp.float32)
    o_ref[...] = q + b4_ref[0, 0]


@functools.partial(jax.jit, static_argnames=("tb",))
def critic_forward(state, action, params, *, tb=512):
    (w1s, w1a, b1), (w2, b2), (w3, b3), (w4, b4) = params
    B, ds = state.shape
    da = action.shape[1]

    # Batch tile: multiple of 8 sublanes, up to `tb` rows; pad B up to a tile multiple.
    TB = min(tb, ((B + 7) // 8) * 8)
    Bp = pl.cdiv(B, TB) * TB
    if Bp != B:
        pad = Bp - B
        state = jnp.pad(state, ((0, pad), (0, 0)))
        action = jnp.pad(action, ((0, pad), (0, 0)))

    state = state.astype(jnp.float32)
    action = action.astype(jnp.float32)

    # Weights / biases stay resident in VMEM across batch tiles (constant index_map).
    resident = lambda a: pl.BlockSpec(a.shape, lambda i: (0,) * a.ndim)

    in_specs = [
        pl.BlockSpec((TB, ds), lambda i: (i, 0)),     # state tile
        pl.BlockSpec((TB, da), lambda i: (i, 0)),     # action tile
        resident(w1s), resident(w1a), resident(b1),
        resident(w2), resident(b2),
        resident(w3), resident(b3),
        resident(w4),
        pl.BlockSpec(memory_space=pltpu.MemorySpace.SMEM),   # b4 scalar
    ]

    out = pl.pallas_call(
        critic_kernel,
        out_shape=jax.ShapeDtypeStruct((Bp, 1), jnp.float32),
        grid=(Bp // TB,),
        in_specs=in_specs,
        out_specs=pl.BlockSpec((TB, 1), lambda i: (i, 0)),
        compiler_params=pltpu.CompilerParams(
            dimension_semantics=("parallel",)),
    )(state, action, w1s, w1a, b1, w2, b2, w3, b3, w4, b4)

    return out[:B]


def init_linear(key, fan_in, fan_out):
    # torch.nn.Linear default init: U(-1/sqrt(fan_in), 1/sqrt(fan_in)),
    # stored as (in, out) for x @ W; weights cast to bf16 once at init.
    kw, kb = jax.random.split(key)
    bound = 1.0 / float(fan_in) ** 0.5
    w = jax.random.uniform(kw, (fan_in, fan_out), jnp.float32, -bound, bound)
    b = jax.random.uniform(kb, (1, fan_out), jnp.float32, -bound, bound)
    return w.astype(jnp.bfloat16), b


if __name__ == "__main__":
    key = jax.random.PRNGKey(0)
    B = 8
    obs_shape = 24
    action_shape = 8
    d_in = obs_shape + action_shape

    k_s, k_a, k1, k2, k3, k4 = jax.random.split(key, 6)
    state = jax.random.normal(k_s, (B, obs_shape), jnp.float32)
    action = jax.random.normal(k_a, (B, action_shape), jnp.float32)

    w1, b1 = init_linear(k1, d_in, 256)
    params = (
        (w1[:obs_shape], w1[obs_shape:], b1),   # fc1 pre-split: state part / action part
        init_linear(k2, 256, 128),
        init_linear(k3, 128, 128),
        init_linear(k4, 128, 1),
    )

    q = critic_forward(state, action, params)
    jax.block_until_ready(q)

    # Pure-JAX reference of the same (bf16-weight) forward pass.
    (w1s, w1a, rb1), (rw2, rb2), (rw3, rb3), (rw4, rb4) = params
    h = jnp.dot(state.astype(jnp.bfloat16), w1s, preferred_element_type=jnp.float32) \
        + jnp.dot(action.astype(jnp.bfloat16), w1a, preferred_element_type=jnp.float32)
    h = jnp.maximum(h + rb1, 0.0)
    h = jnp.maximum(jnp.dot(h.astype(jnp.bfloat16), rw2,
                            preferred_element_type=jnp.float32) + rb2, 0.0)
    h = jnp.maximum(jnp.dot(h.astype(jnp.bfloat16), rw3,
                            preferred_element_type=jnp.float32) + rb3, 0.0)
    ref = jnp.dot(h.astype(jnp.bfloat16), rw4,
                  preferred_element_type=jnp.float32) + rb4

    assert q.shape == (B, 1)
    assert jnp.allclose(q, ref, atol=2e-3, rtol=2e-3)

    print("KERNEL_OK")
</pallas_src>

<mosaic_0001>
module attributes {stable_mosaic.version = 11 : i64} {
  func.func @critic_kernel(%arg0: i32, %arg1: memref<8x24xf32, #tpu.memory_space<vmem>>, %arg2: memref<8x8xf32, #tpu.memory_space<vmem>>, %arg3: memref<24x256xbf16, #tpu.memory_space<vmem>>, %arg4: memref<8x256xbf16, #tpu.memory_space<vmem>>, %arg5: memref<1x256xf32, #tpu.memory_space<vmem>>, %arg6: memref<256x128xbf16, #tpu.memory_space<vmem>>, %arg7: memref<1x128xf32, #tpu.memory_space<vmem>>, %arg8: memref<128x128xbf16, #tpu.memory_space<vmem>>, %arg9: memref<1x128xf32, #tpu.memory_space<vmem>>, %arg10: memref<128x1xbf16, #tpu.memory_space<vmem>>, %arg11: memref<1x1xf32, #tpu.memory_space<smem>>, %arg12: memref<8x1xf32, #tpu.memory_space<vmem>>) attributes {dimension_semantics = [#tpu.dimension_semantics<parallel>], iteration_bounds = array<i64: 1>, scalar_prefetch = 0 : i64, scratch_operands = 0 : i64, tpu.core_type = #tpu.core_type<tc>, window_params = [{transform_indices = @transform_0, window_bounds = array<i64: 8, 24>}, {transform_indices = @transform_1, window_bounds = array<i64: 8, 8>}, {pipeline_mode = #tpu.pipeline_mode<synchronous>, transform_indices = @transform_2, window_bounds = array<i64: 24, 256>}, {pipeline_mode = #tpu.pipeline_mode<synchronous>, transform_indices = @transform_3, window_bounds = array<i64: 8, 256>}, {pipeline_mode = #tpu.pipeline_mode<synchronous>, transform_indices = @transform_4, window_bounds = array<i64: 1, 256>}, {pipeline_mode = #tpu.pipeline_mode<synchronous>, transform_indices = @transform_5, window_bounds = array<i64: 256, 128>}, {pipeline_mode = #tpu.pipeline_mode<synchronous>, transform_indices = @transform_6, window_bounds = array<i64: 1, 128>}, {pipeline_mode = #tpu.pipeline_mode<synchronous>, transform_indices = @transform_7, window_bounds = array<i64: 128, 128>}, {pipeline_mode = #tpu.pipeline_mode<synchronous>, transform_indices = @transform_8, window_bounds = array<i64: 1, 128>}, {pipeline_mode = #tpu.pipeline_mode<synchronous>, transform_indices = @transform_9, window_bounds = array<i64: 128, 1>}, {transform_indices = @transform_10, window_bounds = array<i64: 1, 1>}, {transform_indices = @transform_11, window_bounds = array<i64: 8, 1>}]} {
    %c0 = arith.constant 0 : index
    %c0_0 = arith.constant 0 : index
    %0 = vector.load %arg1[%c0, %c0_0] : memref<8x24xf32, #tpu.memory_space<vmem>>, vector<8x24xf32>
    %1 = arith.truncf %0 : vector<8x24xf32> to vector<8x24xbf16>
    %c0_1 = arith.constant 0 : index
    %c0_2 = arith.constant 0 : index
    %2 = vector.load %arg3[%c0_1, %c0_2] : memref<24x256xbf16, #tpu.memory_space<vmem>>, vector<24x256xbf16>
    %cst = arith.constant dense<0.000000e+00> : vector<8x256xf32>
    %3 = tpu.matmul %1, %2, %cst {dimension_numbers = #tpu.dot_dimension_numbers<[1], [0], [0], [1], [0, 0, 1, 1], [], []>} : vector<8x24xbf16>, vector<24x256xbf16>, vector<8x256xf32> -> vector<8x256xf32>
    %c0_3 = arith.constant 0 : index
    %c0_4 = arith.constant 0 : index
    %4 = vector.load %arg2[%c0_3, %c0_4] : memref<8x8xf32, #tpu.memory_space<vmem>>, vector<8x8xf32>
    %5 = arith.truncf %4 : vector<8x8xf32> to vector<8x8xbf16>
    %c0_5 = arith.constant 0 : index
    %c0_6 = arith.constant 0 : index
    %6 = vector.load %arg4[%c0_5, %c0_6] : memref<8x256xbf16, #tpu.memory_space<vmem>>, vector<8x256xbf16>
    %cst_7 = arith.constant dense<0.000000e+00> : vector<8x256xf32>
    %7 = tpu.matmul %5, %6, %cst_7 {dimension_numbers = #tpu.dot_dimension_numbers<[1], [0], [0], [1], [0, 0, 1, 1], [], []>} : vector<8x8xbf16>, vector<8x256xbf16>, vector<8x256xf32> -> vector<8x256xf32>
    %8 = arith.addf %3, %7 : vector<8x256xf32>
    %c0_8 = arith.constant 0 : index
    %c0_9 = arith.constant 0 : index
    %9 = vector.load %arg5[%c0_8, %c0_9] : memref<1x256xf32, #tpu.memory_space<vmem>>, vector<1x256xf32>
    %10 = vector.broadcast %9 : vector<1x256xf32> to vector<8x256xf32>
    %11 = arith.addf %8, %10 : vector<8x256xf32>
    %cst_10 = arith.constant 0.000000e+00 : f32
    %12 = vector.broadcast %cst_10 : f32 to vector<8x256xf32>
    %13 = arith.maximumf %11, %12 : vector<8x256xf32>
    %14 = arith.truncf %13 : vector<8x256xf32> to vector<8x256xbf16>
    %c0_11 = arith.constant 0 : index
    %c0_12 = arith.constant 0 : index
    %15 = vector.load %arg6[%c0_11, %c0_12] : memref<256x128xbf16, #tpu.memory_space<vmem>>, vector<256x128xbf16>
    %cst_13 = arith.constant dense<0.000000e+00> : vector<8x128xf32>
    %16 = tpu.matmul %14, %15, %cst_13 {dimension_numbers = #tpu.dot_dimension_numbers<[1], [0], [0], [1], [0, 0, 1, 1], [], []>} : vector<8x256xbf16>, vector<256x128xbf16>, vector<8x128xf32> -> vector<8x128xf32>
    %c0_14 = arith.constant 0 : index
    %c0_15 = arith.constant 0 : index
    %17 = vector.load %arg7[%c0_14, %c0_15] : memref<1x128xf32, #tpu.memory_space<vmem>>, vector<1x128xf32>
    %18 = vector.broadcast %17 : vector<1x128xf32> to vector<8x128xf32>
    %19 = arith.addf %16, %18 : vector<8x128xf32>
    %cst_16 = arith.constant 0.000000e+00 : f32
    %20 = vector.broadcast %cst_16 : f32 to vector<8x128xf32>
    %21 = arith.maximumf %19, %20 : vector<8x128xf32>
    %22 = arith.truncf %21 : vector<8x128xf32> to vector<8x128xbf16>
    %c0_17 = arith.constant 0 : index
    %c0_18 = arith.constant 0 : index
    %23 = vector.load %arg8[%c0_17, %c0_18] : memref<128x128xbf16, #tpu.memory_space<vmem>>, vector<128x128xbf16>
    %cst_19 = arith.constant dense<0.000000e+00> : vector<8x128xf32>
    %24 = tpu.matmul %22, %23, %cst_19 {dimension_numbers = #tpu.dot_dimension_numbers<[1], [0], [0], [1], [0, 0, 1, 1], [], []>} : vector<8x128xbf16>, vector<128x128xbf16>, vector<8x128xf32> -> vector<8x128xf32>
    %c0_20 = arith.constant 0 : index
    %c0_21 = arith.constant 0 : index
    %25 = vector.load %arg9[%c0_20, %c0_21] : memref<1x128xf32, #tpu.memory_space<vmem>>, vector<1x128xf32>
    %26 = vector.broadcast %25 : vector<1x128xf32> to vector<8x128xf32>
    %27 = arith.addf %24, %26 : vector<8x128xf32>
    %cst_22 = arith.constant 0.000000e+00 : f32
    %28 = vector.broadcast %cst_22 : f32 to vector<8x128xf32>
    %29 = arith.maximumf %27, %28 : vector<8x128xf32>
    %30 = arith.truncf %29 : vector<8x128xf32> to vector<8x128xbf16>
    %c0_23 = arith.constant 0 : index
    %c0_24 = arith.constant 0 : index
    %31 = vector.load %arg10[%c0_23, %c0_24] : memref<128x1xbf16, #tpu.memory_space<vmem>>, vector<128x1xbf16>
    %cst_25 = arith.constant dense<0.000000e+00> : vector<8x1xf32>
    %32 = tpu.matmul %30, %31, %cst_25 {dimension_numbers = #tpu.dot_dimension_numbers<[1], [0], [0], [1], [0, 0, 1, 1], [], []>} : vector<8x128xbf16>, vector<128x1xbf16>, vector<8x1xf32> -> vector<8x1xf32>
    %c0_26 = arith.constant 0 : index
    %c0_27 = arith.constant 0 : index
    %33 = memref.load %arg11[%c0_26, %c0_27] : memref<1x1xf32, #tpu.memory_space<smem>>
    %34 = vector.broadcast %33 : f32 to vector<8x1xf32>
    %35 = arith.addf %32, %34 : vector<8x1xf32>
    %c0_28 = arith.constant 0 : index
    %c0_29 = arith.constant 0 : index
    %36 = vector.load %arg12[%c0_28, %c0_29] : memref<8x1xf32, #tpu.memory_space<vmem>>, vector<8x1xf32>
    tpu.vector_store %arg12[%c0_28, %c0_29], %35 {strides = array<i32>} : memref<8x1xf32, #tpu.memory_space<vmem>>, vector<8x1xf32>,
    return
  }
  func.func @transform_0(%arg0: i32) -> (i32, i32) {
    %c0_i32 = arith.constant 0 : i32
    %c0_i32_0 = arith.constant 0 : i32
    return %arg0, %c0_i32 : i32, i32
  }
  func.func @transform_1(%arg0: i32) -> (i32, i32) {
    %c0_i32 = arith.constant 0 : i32
    %c0_i32_0 = arith.constant 0 : i32
    return %arg0, %c0_i32 : i32, i32
  }
  func.func @transform_2(%arg0: i32) -> (i32, i32) {
    %c0_i32 = arith.constant 0 : i32
    %c0_i32_0 = arith.constant 0 : i32
    %c0_i32_1 = arith.constant 0 : i32
    return %c0_i32, %c0_i32_0 : i32, i32
  }
  func.func @transform_3(%arg0: i32) -> (i32, i32) {
    %c0_i32 = arith.constant 0 : i32
    %c0_i32_0 = arith.constant 0 : i32
    %c0_i32_1 = arith.constant 0 : i32
    return %c0_i32, %c0_i32_0 : i32, i32
  }
  func.func @transform_4(%arg0: i32) -> (i32, i32) {
    %c0_i32 = arith.constant 0 : i32
    %c0_i32_0 = arith.constant 0 : i32
    %c0_i32_1 = arith.constant 0 : i32
    return %c0_i32, %c0_i32_0 : i32, i32
  }
  func.func @transform_5(%arg0: i32) -> (i32, i32) {
    %c0_i32 = arith.constant 0 : i32
    %c0_i32_0 = arith.constant 0 : i32
    %c0_i32_1 = arith.constant 0 : i32
    return %c0_i32, %c0_i32_0 : i32, i32
  }
  func.func @transform_6(%arg0: i32) -> (i32, i32) {
    %c0_i32 = arith.constant 0 : i32
    %c0_i32_0 = arith.constant 0 : i32
    %c0_i32_1 = arith.constant 0 : i32
    return %c0_i32, %c0_i32_0 : i32, i32
  }
  func.func @transform_7(%arg0: i32) -> (i32, i32) {
    %c0_i32 = arith.constant 0 : i32
    %c0_i32_0 = arith.constant 0 : i32
    %c0_i32_1 = arith.constant 0 : i32
    return %c0_i32, %c0_i32_0 : i32, i32
  }
  func.func @transform_8(%arg0: i32) -> (i32, i32) {
    %c0_i32 = arith.constant 0 : i32
    %c0_i32_0 = arith.constant 0 : i32
    %c0_i32_1 = arith.constant 0 : i32
    return %c0_i32, %c0_i32_0 : i32, i32
  }
  func.func @transform_9(%arg0: i32) -> (i32, i32) {
    %c0_i32 = arith.constant 0 : i32
    %c0_i32_0 = arith.constant 0 : i32
    %c0_i32_1 = arith.constant 0 : i32
    return %c0_i32, %c0_i32_0 : i32, i32
  }
  func.func @transform_10(%arg0: i32) -> (i32, i32) {
    %c0_i32 = arith.constant 0 : i32
    %c0_i32_0 = arith.constant 0 : i32
    %c0_i32_1 = arith.constant 0 : i32
    return %c0_i32, %c0_i32_0 : i32, i32
  }
  func.func @transform_11(%arg0: i32) -> (i32, i32) {
    %c0_i32 = arith.constant 0 : i32
    %c0_i32_0 = arith.constant 0 : i32
    return %arg0, %c0_i32 : i32, i32
  }
}

</mosaic_0001>

<llo_original>
// kernel: critic_forward.1
$region0: #{critic_forward.1}
  #allocation0 [shape = 'u32[]', space=smem, size = 0x4, offset = 0x4, fixed_abs, tag = 'smem constant byte address 0x4 - core index']
  #allocation1 [shape = 'u32[72,128]{1,0:T(1,128)}', space=vmem, size = 0x9000, scoped, tag = 'internal scratch']
  #allocation2 [shape = 'f32[1,1]{1,0:T(1,128)S(6)}', space=smem, size = 0x200, scoped, tag = 'scoped memory for critic_forward.1']
  %s0 = inlined_call_operand.hbm [shape: f32[8,24], index: 0, kind: input, shape index: {}]
  %s1 = inlined_call_operand.hbm [shape: f32[8,8], index: 1, kind: input, shape index: {}]
  %s2 = inlined_call_operand.hbm [shape: bf16[24,256], index: 2, kind: input, shape index: {}]
  %s3 = inlined_call_operand.hbm [shape: bf16[8,256], index: 3, kind: input, shape index: {}]
  %s4 = inlined_call_operand.vmem [shape: f32[1,256], index: 4, kind: input, shape index: {}]
  %s5 = inlined_call_operand.hbm [shape: bf16[256,128], index: 5, kind: input, shape index: {}]
  %s6 = inlined_call_operand.vmem [shape: f32[1,128], index: 6, kind: input, shape index: {}]
  %s7 = inlined_call_operand.vmem [shape: bf16[128,128], index: 7, kind: input, shape index: {}]
  %s8 = inlined_call_operand.vmem [shape: f32[1,128], index: 8, kind: input, shape index: {}]
  %s9 = inlined_call_operand.vmem [shape: bf16[128,1], index: 9, kind: input, shape index: {}]
  %s10 = inlined_call_operand.<no memory space> [shape: f32[1,1], index: 10, kind: input, shape index: {}]
  %s11 = inlined_call_operand.vmem [shape: f32[8,1], index: 11, kind: output, shape index: {}]
  %s12 = sld [smem:[#allocation0]]
  $region74: #{critic_forward.1} parent=0
    _
  %s14 = ssub.s32 1, %s12
  %s15 = scalar_select 0, %s14, %s12
  %16 = sst [smem:[#allocation2]] %s10
  $region1: #{critic_forward.1} parent=0
    #allocation3 [shape = 'u8[4096]{0}', space=vmem, size = 0x1000, scoped, tag = 'input window, operand 0, single buffered']
    #allocation4 [shape = 's32[1]{0}', space=sflag, size = 0x4, scoped, tag = 'scoped memory for critic_forward.1']
    #allocation5 [shape = 'u8[4096]{0}', space=vmem, size = 0x1000, scoped, tag = 'input window, operand 1, single buffered']
    #allocation6 [shape = 's32[1]{0}', space=sflag, size = 0x4, scoped, tag = 'scoped memory for critic_forward.1']
    #allocation7 [shape = 'u8[12288]{0}', space=vmem, size = 0x3000, scoped, tag = 'input window, operand 2, single buffered']
    #allocation8 [shape = 'u8[4096]{0}', space=vmem, size = 0x1000, scoped, tag = 'input window, operand 3, single buffered']
    #allocation9 [shape = 's32[1]{0}', space=sflag, size = 0x4, scoped, tag = 'scoped memory for critic_forward.1']
    #allocation10 [shape = 'u8[65536]{0}', space=vmem, size = 0x10000, scoped, tag = 'input window, operand 5, single buffered']
    %17 = vsyncpa [#allocation4], 0
    %18 = vsyncpa [#allocation6], 0
    %19 = vsyncpa [#allocation9], 0
    // Predicated region
    $region2: #{critic_forward.1} parent=1 // pred_check
      _
    $region3: #{critic_forward.1} parent=1 // pred_check_branch
      %21 = sbr.rel (0) target = $region5
    $region4: #{critic_forward.1} parent=1 // pred_region
      %23 = vsyncadd [#allocation4], 0
      %s25 = sshll.u32 %s0, 4
      %s26 = int_to_ptr.hbm [resolvable:$true] %s25
      %s27 = sshll.u32 [#allocation3], 4
      %s28 = int_to_ptr.vmem [resolvable:$true] %s27
      %30 = dma.hbm_to_vmem [thread:$0]  %s26, 128, %s28, [#allocation4]
    $region5: #{critic_forward.1} parent=1 // pred_fallthru
      _
    // Predicated region
    $region6: #{critic_forward.1} parent=1 // pred_check
      _
    $region7: #{critic_forward.1} parent=1 // pred_check_branch
      %32 = sbr.rel (0) target = $region9
    $region8: #{critic_forward.1} parent=1 // pred_region
      %34 = vsyncadd [#allocation6], 0
      %s36 = sshll.u32 %s1, 4
      %s37 = int_to_ptr.hbm [resolvable:$true] %s36
      %s38 = sshll.u32 [#allocation5], 4
      %s39 = int_to_ptr.vmem [resolvable:$true] %s38
      %41 = dma.hbm_to_vmem [thread:$0]  %s37, 128, %s39, [#allocation6]
    $region9: #{critic_forward.1} parent=1 // pred_fallthru
      _
    // Predicated region
    $region10: #{critic_forward.1} parent=1 // pred_check
      _
    $region11: #{critic_forward.1} parent=1 // pred_check_branch
      %43 = sbr.rel (0) target = $region13
    $region12: #{critic_forward.1} parent=1 // pred_region
      %45 = vsyncadd [#allocation6], 0
      %s46 = sshll.u32 %s2, 4
      %s47 = int_to_ptr.hbm [resolvable:$true] %s46
      %s48 = sshll.u32 [#allocation7], 4
      %s49 = int_to_ptr.vmem [resolvable:$true] %s48
      %54 = dma.hbm_to_vmem [thread:$0]  %s47, 384, %s49, [#allocation6], 128, 128, 8
    $region13: #{critic_forward.1} parent=1 // pred_fallthru
      _
    // Predicated region
    $region14: #{critic_forward.1} parent=1 // pred_check
      _
    $region15: #{critic_forward.1} parent=1 // pred_check_branch
      %56 = sbr.rel (0) target = $region17
    $region16: #{critic_forward.1} parent=1 // pred_region
      %58 = vsyncadd [#allocation9], 0
      %s60 = sshll.u32 %s3, 4
      %s61 = int_to_ptr.hbm [resolvable:$true] %s60
      %s62 = sshll.u32 [#allocation8], 4
      %s63 = int_to_ptr.vmem [resolvable:$true] %s62
      %65 = dma.hbm_to_vmem [thread:$0]  %s61, 128, %s63, [#allocation9]
    $region17: #{critic_forward.1} parent=1 // pred_fallthru
      _
    // Predicated region
    $region18: #{critic_forward.1} parent=1 // pred_check
      _
    $region19: #{critic_forward.1} parent=1 // pred_check_branch
      %67 = sbr.rel (0) target = $region21
    $region20: #{critic_forward.1} parent=1 // pred_region
      _
    $region21: #{critic_forward.1} parent=1 // pred_fallthru
      _
    // Predicated region
    $region22: #{critic_forward.1} parent=1 // pred_check
      _
    $region23: #{critic_forward.1} parent=1 // pred_check_branch
      %69 = sbr.rel (0) target = $region25
    $region24: #{critic_forward.1} parent=1 // pred_region
      %71 = vsyncadd [#allocation9], 0
      %s72 = sshll.u32 %s5, 4
      %s73 = int_to_ptr.hbm [resolvable:$true] %s72
      %s74 = sshll.u32 [#allocation10], 4
      %s75 = int_to_ptr.vmem [resolvable:$true] %s74
      %80 = dma.hbm_to_vmem [thread:$0]  %s73, 2048, %s75, [#allocation9], 64, 64, 4
    $region25: #{critic_forward.1} parent=1 // pred_fallthru
      _
    // Predicated region
    $region26: #{critic_forward.1} parent=1 // pred_check
      _
    $region27: #{critic_forward.1} parent=1 // pred_check_branch
      %82 = sbr.rel (0) target = $region29
    $region28: #{critic_forward.1} parent=1 // pred_region
      _
    $region29: #{critic_forward.1} parent=1 // pred_fallthru
      _
    // Predicated region
    $region30: #{critic_forward.1} parent=1 // pred_check
      _
    $region31: #{critic_forward.1} parent=1 // pred_check_branch
      %84 = sbr.rel (0) target = $region33
    $region32: #{critic_forward.1} parent=1 // pred_region
      _
    $region33: #{critic_forward.1} parent=1 // pred_fallthru
      _
    // Predicated region
    $region34: #{critic_forward.1} parent=1 // pred_check
      _
    $region35: #{critic_forward.1} parent=1 // pred_check_branch
      %86 = sbr.rel (0) target = $region37
    $region36: #{critic_forward.1} parent=1 // pred_region
      _
    $region37: #{critic_forward.1} parent=1 // pred_fallthru
      _
    // Predicated region
    $region38: #{critic_forward.1} parent=1 // pred_check
      _
    $region39: #{critic_forward.1} parent=1 // pred_check_branch
      %88 = sbr.rel (0) target = $region41
    $region40: #{critic_forward.1} parent=1 // pred_region
      _
    $region41: #{critic_forward.1} parent=1 // pred_fallthru
      _
    // Predicated region
    $region42: #{critic_forward.1} parent=1 // pred_check
      _
    $region43: #{critic_forward.1} parent=1 // pred_check_branch
      %90 = sbr.rel (0) target = $region45
    $region44: #{critic_forward.1} parent=1 // pred_region
      _
    $region45: #{critic_forward.1} parent=1 // pred_fallthru
      _
    // Predicated region
    $region46: #{critic_forward.1} parent=1 // pred_check
      _
    $region47: #{critic_forward.1} parent=1 // pred_check_branch
      %92 = sbr.rel (0) target = $region49
    $region48: #{critic_forward.1} parent=1 // pred_region
      %94 = dma.done [#allocation4], 128
    $region49: #{critic_forward.1} parent=1 // pred_fallthru
      _
    // Predicated region
    $region50: #{critic_forward.1} parent=1 // pred_check
      _
    $region51: #{critic_forward.1} parent=1 // pred_check_branch
      %96 = sbr.rel (0) target = $region53
    $region52: #{critic_forward.1} parent=1 // pred_region
      %98 = dma.done [#allocation6], 128
    $region53: #{critic_forward.1} parent=1 // pred_fallthru
      _
    // Predicated region
    $region54: #{critic_forward.1} parent=1 // pred_check
      _
    $region55: #{critic_forward.1} parent=1 // pred_check_branch
      %100 = sbr.rel (0) target = $region57
    $region56: #{critic_forward.1} parent=1 // pred_region
      %102 = dma.done [#allocation6], 384
    $region57: #{critic_forward.1} parent=1 // pred_fallthru
      _
    // Predicated region
    $region58: #{critic_forward.1} parent=1 // pred_check
      _
    $region59: #{critic_forward.1} parent=1 // pred_check_branch
      %104 = sbr.rel (0) target = $region61
    $region60: #{critic_forward.1} parent=1 // pred_region
      %106 = dma.done [#allocation9], 128
    $region61: #{critic_forward.1} parent=1 // pred_fallthru
      _
    // Predicated region
    $region62: #{critic_forward.1} parent=1 // pred_check
      _
    $region63: #{critic_forward.1} parent=1 // pred_check_branch
      %108 = sbr.rel (0) target = $region65
    $region64: #{critic_forward.1} parent=1 // pred_region
      %110 = dma.done [#allocation9], 2048
    $region65: #{critic_forward.1} parent=1 // pred_fallthru
      _
    %v112 = vld [vmem:[#allocation3] sm:$0xff]
    %v113 = vpack.c.bf16 %v112, %v112
    %v114 = vld [vmem:[#allocation7] sm:$0xff]
    %v115 = vld [vmem:[#allocation7 + $0x8] sm:$0xff]
    %v116 = vld [vmem:[#allocation7 + $0x10] sm:$0xff]
    %v117 = vld [vmem:[#allocation5] sm:$0xff]
    %v118 = vpack.c.bf16 %v117, %v117
    %v119 = vld [vmem:[#allocation8] sm:$0xff]
    %v121 = vunpack.c.l.b16 %v119
    %v122 = vunpack.c.h.b16 %v119
    %v123 = vpack.c.b16 %v121, %v121
    %v124 = vpack.c.b16 %v122, %v122
    %vm125 = vcmask 64512
    %v127 = vsel %vm125, %v118, 0
    %vm129 = vcmask 1043456
    %v131 = vsel %vm129, %v123, 0
    %v134 = vsel %vm129, %v124, 0
    %136 = vmatpush.bf16.msra.mxu0 0
    %137 = vmatpush.bf16.msra.mxu0 0
    %138 = vmatpush.bf16.msra.mxu0 0
    %139 = vmatpush.bf16.msra.mxu0 0
    %140 = vmatpush.bf16.msra.mxu0 0
    %141 = vmatpush.bf16.msra.mxu0 0
    %142 = vmatpush.bf16.msra.mxu0 0
    %143 = vmatpush.bf16.msra.mxu0 %v131
    %144 = vmatmul.bf16.gmra.mxu0 %v127
    %v145 = vpop.f32.mrf.mxu0
    %v146 = vadd.f32 0.0, %v145
    %v147 = vpop.f32.mrf.mxu0
    %148 = vdwg.mxu0
    %149 = vmatpush.bf16.msra.mxu0 0
    %150 = vmatpush.bf16.msra.mxu0 0
    %151 = vmatpush.bf16.msra.mxu0 0
    %152 = vmatpush.bf16.msra.mxu0 0
    %153 = vmatpush.bf16.msra.mxu0 0
    %154 = vmatpush.bf16.msra.mxu0 0
    %155 = vmatpush.bf16.msra.mxu0 0
    %156 = vmatpush.bf16.msra.mxu0 %v134
    %157 = vmatmul.bf16.gmra.mxu0 %v127
    %v158 = vpop.f32.mrf.mxu0
    %v159 = vadd.f32 0.0, %v158
    %v160 = vpop.f32.mrf.mxu0
    %161 = vdwg.mxu0
    %v165 = vunpack.c.l.b16 %v114
    %v166 = vunpack.c.h.b16 %v114
    %v167 = vunpack.c.l.b16 %v115
    %v168 = vunpack.c.h.b16 %v115
    %v169 = vunpack.c.l.b16 %v116
    %v170 = vunpack.c.h.b16 %v116
    %v171 = vpack.c.b16 %v167, %v165
    %v172 = vpack.c.b16 %v168, %v166
    %v173 = vpack.c.b16 %v169, %v169
    %v174 = vpack.c.b16 %v170, %v170
    %vm177 = vcmask 195584
    %v179 = vsel %vm177, %v113, 0
    %v182 = vsel %vm129, %v173, 0
    %v185 = vsel %vm129, %v174, 0
    %187 = vmatpush.bf16.msra.mxu0 0
    %188 = vmatpush.bf16.msra.mxu0 0
    %189 = vmatpush.bf16.msra.mxu0 0
    %190 = vmatpush.bf16.msra.mxu0 0
    %191 = vmatpush.bf16.msra.mxu0 0
    %192 = vmatpush.bf16.msra.mxu0 0
    %193 = vmatpush.bf16.msra.mxu0 %v182
    %194 = vmatpush.bf16.msra.mxu0 %v171
    %195 = vmatmul.bf16.gmra.mxu0 %v179
    %v196 = vpop.f32.mrf.mxu0
    %v197 = vadd.f32 %v146, %v196
    %v198 = vpop.f32.mrf.mxu0
    %199 = vdwg.mxu0
    %200 = vmatpush.bf16.msra.mxu0 0
    %201 = vmatpush.bf16.msra.mxu0 0
    %202 = vmatpush.bf16.msra.mxu0 0
    %203 = vmatpush.bf16.msra.mxu0 0
    %204 = vmatpush.bf16.msra.mxu0 0
    %205 = vmatpush.bf16.msra.mxu0 0
    %206 = vmatpush.bf16.msra.mxu0 %v185
    %207 = vmatpush.bf16.msra.mxu0 %v172
    %208 = vmatmul.bf16.gmra.mxu0 %v179
    %v209 = vpop.f32.mrf.mxu0
    %v210 = vadd.f32 %v159, %v209
    %v211 = vpop.f32.mrf.mxu0
    %212 = vdwg.mxu0
    %v213 = vld [vmem:[%s4] sm:$0x3]
    %v215 = vperm.slane %v213, 0
    %v216 = vperm.slane %v213, 1
    %v219 = vadd.f32 %v197, %v215
    %v220 = vadd.f32 %v210, %v216
    %v221 = vmax.f32 %v219, 0.0
    %v222 = vmax.f32 %v220, 0.0
    %v223 = vpack.c.bf16 %v221, %v221
    %v224 = vpack.c.bf16 %v222, %v222
    %v225 = vld [vmem:[#allocation10] sm:$0xf]
    %v226 = vld [vmem:[#allocation10 + $0x4] sm:$0xf]
    %v227 = vld [vmem:[#allocation10 + $0x8] sm:$0xf]
    %v228 = vld [vmem:[#allocation10 + $0xc] sm:$0xf]
    %v229 = vld [vmem:[#allocation10 + $0x10] sm:$0xf]
    %v230 = vld [vmem:[#allocation10 + $0x14] sm:$0xf]
    %v231 = vld [vmem:[#allocation10 + $0x18] sm:$0xf]
    %v232 = vld [vmem:[#allocation10 + $0x1c] sm:$0xf]
    %v233 = vld [vmem:[#allocation10 + $0x20] sm:$0xf]
    %v234 = vld [vmem:[#allocation10 + $0x24] sm:$0xf]
    %v235 = vld [vmem:[#allocation10 + $0x28] sm:$0xf]
    %v236 = vld [vmem:[#allocation10 + $0x2c] sm:$0xf]
    %v237 = vld [vmem:[#allocation10 + $0x30] sm:$0xf]
    %v238 = vld [vmem:[#allocation10 + $0x34] sm:$0xf]
    %v239 = vld [vmem:[#allocation10 + $0x38] sm:$0xf]
    %v240 = vld [vmem:[#allocation10 + $0x3c] sm:$0xf]
    %v241 = vld [vmem:[#allocation10 + $0x40] sm:$0xf]
    %v242 = vld [vmem:[#allocation10 + $0x44] sm:$0xf]
    %v243 = vld [vmem:[#allocation10 + $0x48] sm:$0xf]
    %v244 = vld [vmem:[#allocation10 + $0x4c] sm:$0xf]
    %v245 = vld [vmem:[#allocation10 + $0x50] sm:$0xf]
    %v246 = vld [vmem:[#allocation10 + $0x54] sm:$0xf]
    %v247 = vld [vmem:[#allocation10 + $0x58] sm:$0xf]
    %v248 = vld [vmem:[#allocation10 + $0x5c] sm:$0xf]
    %v249 = vld [vmem:[#allocation10 + $0x60] sm:$0xf]
    %v250 = vld [vmem:[#allocation10 + $0x64] sm:$0xf]
    %v251 = vld [vmem:[#allocation10 + $0x68] sm:$0xf]
    %v252 = vld [vmem:[#allocation10 + $0x6c] sm:$0xf]
    %v253 = vld [vmem:[#allocation10 + $0x70] sm:$0xf]
    %v254 = vld [vmem:[#allocation10 + $0x74] sm:$0xf]
    %v255 = vld [vmem:[#allocation10 + $0x78] sm:$0xf]
    %v256 = vld [vmem:[#allocation10 + $0x7c] sm:$0xf]
    %v257 = vld [vmem:[%s6] sm:$0x1]
    %v259 = vperm.slane %v257, 0
    %v293 = vunpack.c.l.b16 %v225
    %v294 = vunpack.c.l.b16 %v226
    %v295 = vunpack.c.l.b16 %v227
    %v296 = vunpack.c.l.b16 %v228
    %v297 = vunpack.c.l.b16 %v229
    %v298 = vunpack.c.l.b16 %v230
    %v299 = vunpack.c.l.b16 %v231
    %v300 = vunpack.c.l.b16 %v232
    %v301 = vunpack.c.l.b16 %v233
    %v302 = vunpack.c.l.b16 %v234
    %v303 = vunpack.c.l.b16 %v235
    %v304 = vunpack.c.l.b16 %v236
    %v305 = vunpack.c.l.b16 %v237
    %v306 = vunpack.c.l.b16 %v238
    %v307 = vunpack.c.l.b16 %v239
    %v308 = vunpack.c.l.b16 %v240
    %v309 = vunpack.c.l.b16 %v241
    %v310 = vunpack.c.l.b16 %v242
    %v311 = vunpack.c.l.b16 %v243
    %v312 = vunpack.c.l.b16 %v244
    %v313 = vunpack.c.l.b16 %v245
    %v314 = vunpack.c.l.b16 %v246
    %v315 = vunpack.c.l.b16 %v247
    %v316 = vunpack.c.l.b16 %v248
    %v317 = vunpack.c.l.b16 %v249
    %v318 = vunpack.c.l.b16 %v250
    %v319 = vunpack.c.l.b16 %v251
    %v320 = vunpack.c.l.b16 %v252
    %v321 = vunpack.c.l.b16 %v253
    %v322 = vunpack.c.l.b16 %v254
    %v323 = vunpack.c.l.b16 %v255
    %v324 = vunpack.c.l.b16 %v256
    %v325 = vpack.c.b16 %v294, %v293
    %v326 = vpack.c.b16 %v296, %v295
    %v327 = vpack.c.b16 %v298, %v297
    %v328 = vpack.c.b16 %v300, %v299
    %v329 = vpack.c.b16 %v302, %v301
    %v330 = vpack.c.b16 %v304, %v303
    %v331 = vpack.c.b16 %v306, %v305
    %v332 = vpack.c.b16 %v308, %v307
    %v333 = vpack.c.b16 %v310, %v309
    %v334 = vpack.c.b16 %v312, %v311
    %v335 = vpack.c.b16 %v314, %v313
    %v336 = vpack.c.b16 %v316, %v315
    %v337 = vpack.c.b16 %v318, %v317
    %v338 = vpack.c.b16 %v320, %v319
    %v339 = vpack.c.b16 %v322, %v321
    %v340 = vpack.c.b16 %v324, %v323
    %357 = vmatpush.bf16.msra.mxu0 %v332
    %358 = vmatpush.bf16.msra.mxu0 %v331
    %359 = vmatpush.bf16.msra.mxu0 %v330
    %360 = vmatpush.bf16.msra.mxu0 %v329
    %361 = vmatpush.bf16.msra.mxu0 %v328
    %362 = vmatpush.bf16.msra.mxu0 %v327
    %363 = vmatpush.bf16.msra.mxu0 %v326
    %364 = vmatpush.bf16.msra.mxu0 %v325
    %365 = vmatmul.bf16.gmra.mxu0 %v223
    %v366 = vpop.f32.mrf.mxu0
    %v367 = vadd.f32 %v259, %v366
    %v368 = vpop.f32.mrf.mxu0
    %369 = vdwg.mxu0
    %370 = vmatpush.bf16.msra.mxu0 %v340
    %371 = vmatpush.bf16.msra.mxu0 %v339
    %372 = vmatpush.bf16.msra.mxu0 %v338
    %373 = vmatpush.bf16.msra.mxu0 %v337
    %374 = vmatpush.bf16.msra.mxu0 %v336
    %375 = vmatpush.bf16.msra.mxu0 %v335
    %376 = vmatpush.bf16.msra.mxu0 %v334
    %377 = vmatpush.bf16.msra.mxu0 %v333
    %378 = vmatmul.bf16.gmra.mxu0 %v224
    %v379 = vpop.f32.mrf.mxu0
    %v380 = vadd.f32 %v367, %v379
    %v381 = vpop.f32.mrf.mxu0
    %382 = vdwg.mxu0
    %v383 = vmax.f32 %v380, 0.0
    %v384 = vpack.c.bf16 %v383, %v383
    %v385 = vld [vmem:[%s7] sm:$0xf]
    %v386 = vld [vmem:[%s7 + $0x4] sm:$0xf]
    %v387 = vld [vmem:[%s7 + $0x8] sm:$0xf]
    %v388 = vld [vmem:[%s7 + $0xc] sm:$0xf]
    %v389 = vld [vmem:[%s7 + $0x10] sm:$0xf]
    %v390 = vld [vmem:[%s7 + $0x14] sm:$0xf]
    %v391 = vld [vmem:[%s7 + $0x18] sm:$0xf]
    %v392 = vld [vmem:[%s7 + $0x1c] sm:$0xf]
    %v393 = vld [vmem:[%s7 + $0x20] sm:$0xf]
    %v394 = vld [vmem:[%s7 + $0x24] sm:$0xf]
    %v395 = vld [vmem:[%s7 + $0x28] sm:$0xf]
    %v396 = vld [vmem:[%s7 + $0x2c] sm:$0xf]
    %v397 = vld [vmem:[%s7 + $0x30] sm:$0xf]
    %v398 = vld [vmem:[%s7 + $0x34] sm:$0xf]
    %v399 = vld [vmem:[%s7 + $0x38] sm:$0xf]
    %v400 = vld [vmem:[%s7 + $0x3c] sm:$0xf]
    %v401 = vld [vmem:[%s8] sm:$0x1]
    %v403 = vperm.slane %v401, 0
    %v421 = vunpack.c.l.b16 %v385
    %v422 = vunpack.c.l.b16 %v386
    %v423 = vunpack.c.l.b16 %v387
    %v424 = vunpack.c.l.b16 %v388
    %v425 = vunpack.c.l.b16 %v389
    %v426 = vunpack.c.l.b16 %v390
    %v427 = vunpack.c.l.b16 %v391
    %v428 = vunpack.c.l.b16 %v392
    %v429 = vunpack.c.l.b16 %v393
    %v430 = vunpack.c.l.b16 %v394
    %v431 = vunpack.c.l.b16 %v395
    %v432 = vunpack.c.l.b16 %v396
    %v433 = vunpack.c.l.b16 %v397
    %v434 = vunpack.c.l.b16 %v398
    %v435 = vunpack.c.l.b16 %v399
    %v436 = vunpack.c.l.b16 %v400
    %v437 = vpack.c.b16 %v422, %v421
    %v438 = vpack.c.b16 %v424, %v423
    %v439 = vpack.c.b16 %v426, %v425
    %v440 = vpack.c.b16 %v428, %v427
    %v441 = vpack.c.b16 %v430, %v429
    %v442 = vpack.c.b16 %v432, %v431
    %v443 = vpack.c.b16 %v434, %v433
    %v444 = vpack.c.b16 %v436, %v435
    %453 = vmatpush.bf16.msra.mxu0 %v444
    %454 = vmatpush.bf16.msra.mxu0 %v443
    %455 = vmatpush.bf16.msra.mxu0 %v442
    %456 = vmatpush.bf16.msra.mxu0 %v441
    %457 = vmatpush.bf16.msra.mxu0 %v440
    %458 = vmatpush.bf16.msra.mxu0 %v439
    %459 = vmatpush.bf16.msra.mxu0 %v438
    %460 = vmatpush.bf16.msra.mxu0 %v437
    %461 = vmatmul.bf16.gmra.mxu0 %v384
    %v462 = vpop.f32.mrf.mxu0
    %v463 = vadd.f32 %v403, %v462
    %v464 = vpop.f32.mrf.mxu0
    %465 = vdwg.mxu0
    %v466 = vmax.f32 %v463, 0.0
    %v467 = vpack.c.bf16 %v466, %v466
    %v468 = vld [vmem:[%s9] sm:$0xf]
    %v469 = vld [vmem:[%s9 + $0x4] sm:$0xf]
    %v470 = vld [vmem:[%s9 + $0x8] sm:$0xf]
    %v471 = vld [vmem:[%s9 + $0xc] sm:$0xf]
    %v472 = vld [vmem:[%s9 + $0x10] sm:$0xf]
    %v473 = vld [vmem:[%s9 + $0x14] sm:$0xf]
    %v474 = vld [vmem:[%s9 + $0x18] sm:$0xf]
    %v475 = vld [vmem:[%s9 + $0x1c] sm:$0xf]
    %v476 = vld [vmem:[%s9 + $0x20] sm:$0xf]
    %v477 = vld [vmem:[%s9 + $0x24] sm:$0xf]
    %v478 = vld [vmem:[%s9 + $0x28] sm:$0xf]
    %v479 = vld [vmem:[%s9 + $0x2c] sm:$0xf]
    %v480 = vld [vmem:[%s9 + $0x30] sm:$0xf]
    %v481 = vld [vmem:[%s9 + $0x34] sm:$0xf]
    %v482 = vld [vmem:[%s9 + $0x38] sm:$0xf]
    %v483 = vld [vmem:[%s9 + $0x3c] sm:$0xf]
    %s484 = sld [smem:[#allocation2]]
    %v485 = vstv %s484
    %v502 = vunpack.c.l.b16 %v468
    %v503 = vunpack.c.l.b16 %v469
    %v504 = vunpack.c.l.b16 %v470
    %v505 = vunpack.c.l.b16 %v471
    %v506 = vunpack.c.l.b16 %v472
    %v507 = vunpack.c.l.b16 %v473
    %v508 = vunpack.c.l.b16 %v474
    %v509 = vunpack.c.l.b16 %v475
    %v510 = vunpack.c.l.b16 %v476
    %v511 = vunpack.c.l.b16 %v477
    %v512 = vunpack.c.l.b16 %v478
    %v513 = vunpack.c.l.b16 %v479
    %v514 = vunpack.c.l.b16 %v480
    %v515 = vunpack.c.l.b16 %v481
    %v516 = vunpack.c.l.b16 %v482
    %v517 = vunpack.c.l.b16 %v483
    %v518 = vpack.c.b16 %v503, %v502
    %v519 = vpack.c.b16 %v505, %v504
    %v520 = vpack.c.b16 %v507, %v506
    %v521 = vpack.c.b16 %v509, %v508
    %v522 = vpack.c.b16 %v511, %v510
    %v523 = vpack.c.b16 %v513, %v512
    %v524 = vpack.c.b16 %v515, %v514
    %v525 = vpack.c.b16 %v517, %v516
    %534 = vmatpush.bf16.msra.mxu0 %v525
    %535 = vmatpush.bf16.msra.mxu0 %v524
    %536 = vmatpush.bf16.msra.mxu0 %v523
    %537 = vmatpush.bf16.msra.mxu0 %v522
    %538 = vmatpush.bf16.msra.mxu0 %v521
    %539 = vmatpush.bf16.msra.mxu0 %v520
    %540 = vmatpush.bf16.msra.mxu0 %v519
    %541 = vmatpush.bf16.msra.mxu0 %v518
    %542 = vmatmul.bf16.gmra.mxu0 %v467
    %v543 = vpop.f32.mrf.mxu0
    %v544 = vadd.f32 %v485, %v543
    %v545 = vpop.f32.mrf.mxu0
    %546 = vdwg.mxu0
    %vm547 = vcmask 7168
    %548 = vst.msk [vmem:[%s11] sm:$0xff] %vm547, %v544
    // Predicated region
    $region66: #{critic_forward.1} parent=1 // pred_check
      _
    $region67: #{critic_forward.1} parent=1 // pred_check_branch
      %550 = sbr.rel (0) target = $region69
    $region68: #{critic_forward.1} parent=1 // pred_region
      _
    $region69: #{critic_forward.1} parent=1 // pred_fallthru
      _
    // Predicated region
    $region70: #{critic_forward.1} parent=1 // pred_check
      _
    $region71: #{critic_forward.1} parent=1 // pred_check_branch
      %552 = sbr.rel (0) target = $region73
    $region72: #{critic_forward.1} parent=1 // pred_region
      _
    $region73: #{critic_forward.1} parent=1 // pred_fallthru
      _
    %553 = vsyncpa [#allocation4], 1
    %554 = vsyncpa [#allocation6], 1
    %555 = vsyncpa [#allocation9], 1

</llo_original>
